<compile_context>
chip_gen: v6e
topology: v6e:2x2x1
jax: 0.10.0
libtpu: 0.0.40
codegen_flags: <defaults>
</compile_context>

<pallas_src>
from functools import partial

import jax
import jax.numpy as jnp
from jax import lax
from jax.experimental import pallas as pl
from jax.experimental.pallas import tpu as pltpu

_BIAS_COL = 128  # lane-tile-aligned column where the bias rows live in the blob


def _mlp_kernel(x_ref, params_ref, o_ref):
    # x:      (B, D)      float32
    # params: (2*Hp, D)   float32  (packed w1t / w2p / b1 / b2, see header)
    # o:      (B, O)      float32
    Hp = params_ref.shape[0] // 2
    O = o_ref.shape[1]

    x = x_ref[...]                                            # (B, D)
    w1t = params_ref[0:Hp, :]                                 # (Hp, D)
    w2p = params_ref[Hp:2 * Hp, 0:O]                          # (Hp, O)
    b1 = params_ref[Hp:Hp + 1, _BIAS_COL:_BIAS_COL + Hp]      # (1, Hp)
    b2 = params_ref[Hp + 1:Hp + 2, _BIAS_COL:_BIAS_COL + O]   # (1, O)

    # Layer 1: contract D (dim 1 of x) with D (dim 1 of w1t) -> (B, Hp).
    # trans_b contraction keeps w1t lane-dense, no explicit transpose needed.
    h = lax.dot_general(
        x, w1t,
        dimension_numbers=(((1,), (1,)), ((), ())),
        preferred_element_type=jnp.float32,
    )
    # Padded hidden units: w1t rows H..Hp-1 and b1 pad entries are zero,
    # so h[:, H:Hp] = tanh(0) = 0 and zero rows of w2p ignore them anyway.
    h = jnp.tanh(h + b1)

    # Layer 2: (B, Hp) @ (Hp, O) + b2.
    out = jnp.dot(h, w2p, preferred_element_type=jnp.float32) + b2
    o_ref[...] = out.astype(o_ref.dtype)


def prepare_params(w1, b1, w2, b2):
    """One-time host-side repack into a single lane-dense parameter blob.

    w1: (D, H), b1: (H,), w2: (H, O), b2: (O,)  ->  params (2*Hp, D) float32.
    In a real deployment the parameters would be stored in this layout already.
    """
    D, H = w1.shape
    O = w2.shape[1]
    Hp = max(8, -(-H // 8) * 8)          # pad hidden dim to a multiple of 8 sublanes
    assert Hp >= 2 and O <= D and D >= _BIAS_COL + max(Hp, O)

    params = jnp.zeros((2 * Hp, D), jnp.float32)
    params = params.at[:H, :].set(w1.T.astype(jnp.float32))            # w1 transposed
    params = params.at[Hp:Hp + H, :O].set(w2.astype(jnp.float32))      # w2 (zero-padded rows)
    params = params.at[Hp, _BIAS_COL:_BIAS_COL + H].set(b1.astype(jnp.float32))
    params = params.at[Hp + 1, _BIAS_COL:_BIAS_COL + O].set(b2.astype(jnp.float32))
    return params


@partial(jax.jit, static_argnames=("output_dim",))
def basic_4twlffd_forward(x_nchw, params, output_dim):
    """x_nchw: (B, C, H, W) float32. Returns logits (B, output_dim) float32."""
    B = x_nchw.shape[0]
    x_flat = x_nchw.reshape(B, -1)       # nn.Flatten: zero-cost row-major view
    D = x_flat.shape[1]
    Hp = params.shape[0] // 2
    O = output_dim

    vmem = pl.BlockSpec(memory_space=pltpu.MemorySpace.VMEM)
    cost = pl.CostEstimate(
        flops=2 * B * D * Hp + 2 * B * Hp * O,
        transcendentals=B * Hp,
        bytes_accessed=4 * (B * D + 2 * Hp * D + B * O),
    )
    return pl.pallas_call(
        _mlp_kernel,
        out_shape=jax.ShapeDtypeStruct((B, O), jnp.float32),
        in_specs=[vmem, vmem],
        out_specs=vmem,
        cost_estimate=cost,
    )(x_flat, params)


if __name__ == "__main__":
    # Small shapes consistent with the module: x = (batch=2, channels=4, 16, 16)
    # -> input_dim = 4*16*16 = 1024, hidden = 5 (fixed by module), output_dim = 8
    B, C, Himg, Wimg = 2, 4, 16, 16
    input_dim = C * Himg * Wimg
    hidden = 5
    output_dim = 8

    key = jax.random.PRNGKey(0)
    kx, k1, k2, k3, k4 = jax.random.split(key, 5)

    x = jax.random.normal(kx, (B, C, Himg, Wimg), dtype=jnp.float32)

    # Deterministic parameter init (uniform, like torch's default kaiming-uniform range)
    bound1 = 1.0 / (input_dim ** 0.5)
    w1 = jax.random.uniform(k1, (input_dim, hidden), jnp.float32, -bound1, bound1)
    b1 = jax.random.uniform(k2, (hidden,), jnp.float32, -bound1, bound1)
    bound2 = 1.0 / (hidden ** 0.5)
    w2 = jax.random.uniform(k3, (hidden, output_dim), jnp.float32, -bound2, bound2)
    b2 = jax.random.uniform(k4, (output_dim,), jnp.float32, -bound2, bound2)

    # One-time weight repack into a single packed parameter blob (2 DMAs total).
    params = prepare_params(w1, b1, w2, b2)

    logits = basic_4twlffd_forward(x, params, output_dim)
    jax.block_until_ready(logits)

    # Reference check in plain JAX (original parameter layout)
    ref = jnp.tanh(x.reshape(B, -1) @ w1 + b1) @ w2 + b2
    assert logits.shape == (B, output_dim)
    assert jnp.allclose(logits, ref, atol=1e-5, rtol=1e-5)

    print("KERNEL_OK")
</pallas_src>

<mosaic_0001>
module attributes {stable_mosaic.version = 11 : i64} {
  func.func @_mlp_kernel(%arg0: memref<2x1024xf32, #tpu.memory_space<vmem>>, %arg1: memref<16x1024xf32, #tpu.memory_space<vmem>>, %arg2: memref<2x8xf32, #tpu.memory_space<vmem>>) attributes {dimension_semantics = [], scalar_prefetch = 0 : i64, scratch_operands = 0 : i64, tpu.core_type = #tpu.core_type<tc>} {
    %c0 = arith.constant 0 : index
    %c0_0 = arith.constant 0 : index
    %0 = vector.load %arg0[%c0, %c0_0] : memref<2x1024xf32, #tpu.memory_space<vmem>>, vector<2x1024xf32>
    %c0_1 = arith.constant 0 : index
    %c0_2 = arith.constant 0 : index
    %1 = vector.load %arg1[%c0_1, %c0_2] : memref<16x1024xf32, #tpu.memory_space<vmem>>, vector<8x1024xf32>
    %c8 = arith.constant 8 : index
    %c0_3 = arith.constant 0 : index
    %2 = vector.load %arg1[%c8, %c0_3] : memref<16x1024xf32, #tpu.memory_space<vmem>>, vector<8x8xf32>
    %c8_4 = arith.constant 8 : index
    %c128 = arith.constant 128 : index
    %3 = vector.load %arg1[%c8_4, %c128] : memref<16x1024xf32, #tpu.memory_space<vmem>>, vector<1x8xf32>
    %c9 = arith.constant 9 : index
    %c128_5 = arith.constant 128 : index
    %4 = vector.load %arg1[%c9, %c128_5] : memref<16x1024xf32, #tpu.memory_space<vmem>>, vector<1x8xf32>
    %cst = arith.constant dense<0.000000e+00> : vector<2x8xf32>
    %5 = tpu.matmul %0, %1, %cst {dimension_numbers = #tpu.dot_dimension_numbers<[1], [1], [0], [0], [0, 0, 1, 0], [], []>} : vector<2x1024xf32>, vector<8x1024xf32>, vector<2x8xf32> -> vector<2x8xf32>
    %6 = vector.broadcast %3 : vector<1x8xf32> to vector<2x8xf32>
    %7 = arith.addf %5, %6 : vector<2x8xf32>
    %8 = math.tanh %7 : vector<2x8xf32>
    %cst_6 = arith.constant dense<0.000000e+00> : vector<2x8xf32>
    %9 = tpu.matmul %8, %2, %cst_6 {dimension_numbers = #tpu.dot_dimension_numbers<[1], [0], [0], [1], [0, 0, 1, 1], [], []>} : vector<2x8xf32>, vector<8x8xf32>, vector<2x8xf32> -> vector<2x8xf32>
    %10 = vector.broadcast %4 : vector<1x8xf32> to vector<2x8xf32>
    %11 = arith.addf %9, %10 : vector<2x8xf32>
    %c0_7 = arith.constant 0 : index
    %c0_8 = arith.constant 0 : index
    %12 = vector.load %arg2[%c0_7, %c0_8] : memref<2x8xf32, #tpu.memory_space<vmem>>, vector<2x8xf32>
    tpu.vector_store %arg2[%c0_7, %c0_8], %11 {strides = array<i32>} : memref<2x8xf32, #tpu.memory_space<vmem>>, vector<2x8xf32>,
    return
  }
}

</mosaic_0001>

<llo_original>
// kernel: basic_4twlffd_forward.1
$region0: #{basic_4twlffd_forward.1}
  #allocation0 [shape = 'u32[]', space=smem, size = 0x4, offset = 0x4, fixed_abs, tag = 'smem constant byte address 0x4 - core index']
  #allocation1 [shape = 'u32[144,128]{1,0:T(1,128)}', space=vmem, size = 0x12000, scoped, tag = 'internal scratch']
  %s0 = inlined_call_operand.vmem [shape: f32[2,1024], index: 0, kind: input, shape index: {}]
  %s1 = inlined_call_operand.vmem [shape: f32[16,1024], index: 1, kind: input, shape index: {}]
  %s2 = inlined_call_operand.hbm [shape: f32[2,8], index: 2, kind: output, shape index: {}]
  %s3 = sld [smem:[#allocation0]]
  $region18: #{basic_4twlffd_forward.1} parent=0
    _
  %s5 = ssub.s32 1, %s3
  %s6 = scalar_select 0, %s5, %s3
  $region1: #{basic_4twlffd_forward.1} parent=0
    #allocation2 [shape = 'u8[1024]{0}', space=vmem, size = 0x400, scoped, tag = 'output window, operand 0, single buffered']
    #allocation3 [shape = 's32[1]{0}', space=sflag, size = 0x4, scoped, tag = 'scoped memory for basic_4twlffd_forward.1']
    %7 = vsyncpa [#allocation3], 0
    // Predicated region
    $region2: #{basic_4twlffd_forward.1} parent=1 // pred_check
      _
    $region3: #{basic_4twlffd_forward.1} parent=1 // pred_check_branch
      %9 = sbr.rel (0) target = $region5
    $region4: #{basic_4twlffd_forward.1} parent=1 // pred_region
      _
    $region5: #{basic_4twlffd_forward.1} parent=1 // pred_fallthru
      _
    // Predicated region
    $region6: #{basic_4twlffd_forward.1} parent=1 // pred_check
      _
    $region7: #{basic_4twlffd_forward.1} parent=1 // pred_check_branch
      %11 = sbr.rel (0) target = $region9
    $region8: #{basic_4twlffd_forward.1} parent=1 // pred_region
      _
    $region9: #{basic_4twlffd_forward.1} parent=1 // pred_fallthru
      _
    %v12 = vld [vmem:[%s0] sm:$0xff]
    %v13 = vld [vmem:[%s0 + $0x8] sm:$0xff]
    %v14 = vld [vmem:[%s1] sm:$0xff]
    %v15 = vld [vmem:[%s1 + $0x8] sm:$0xff]
    %v16 = vld [vmem:[%s1 + $0x10] sm:$0xff]
    %v17 = vld [vmem:[%s1 + $0x18] sm:$0xff]
    %v18 = vld [vmem:[%s1 + $0x20] sm:$0xff]
    %v19 = vld [vmem:[%s1 + $0x28] sm:$0xff]
    %v20 = vld [vmem:[%s1 + $0x30] sm:$0xff]
    %v21 = vld [vmem:[%s1 + $0x38] sm:$0xff]
    %v22 = vld [vmem:[%s1 + $0x40] sm:$0xff]
    %v23 = vld [vmem:[%s1 + $0x48] ss:$0 sm:$0xff]
    %v24 = vld [vmem:[%s1 + $0x49] ss:$0 sm:$0xff]
    %v27 = vcombine.high %v12, %v12
    %v29 = vunpack.c.l.s4 1983009808
    %v30 = vunpack.c.0.s8 %v29
    %v31 = vlaneseq
    %v32 = vshrl.u32 %v31, 7
    %v33 = vsub.s32 %v30, %v32
    %v34 = vrot.slane %v12, %v33
    %v36 = vunpack.c.l.s4 1983009808
    %v37 = vunpack.c.0.s8 %v36
    %v38 = vlaneseq
    %v39 = vshrl.u32 %v38, 7
    %v40 = vsub.s32 %v37, %v39
    %v41 = vrot.slane %v27, %v40
    %v42 = vcombine.high %v34, %v34
    %v43 = vcombine.high %v41, %v41
    %v44 = vcombine.high %v13, %v13
    %v46 = vunpack.c.l.s4 1983009808
    %v47 = vunpack.c.0.s8 %v46
    %v48 = vlaneseq
    %v49 = vshrl.u32 %v48, 7
    %v50 = vsub.s32 %v47, %v49
    %v51 = vrot.slane %v13, %v50
    %v53 = vunpack.c.l.s4 1983009808
    %v54 = vunpack.c.0.s8 %v53
    %v55 = vlaneseq
    %v56 = vshrl.u32 %v55, 7
    %v57 = vsub.s32 %v54, %v56
    %v58 = vrot.slane %v44, %v57
    %v59 = vcombine.high %v51, %v51
    %v60 = vcombine.high %v58, %v58
    %69 = vmatprep.subr.mxu0 0.0
    %70 = vmatpush1.xpose.msra.mxu0 0.0
    %71 = vmatprep.subr.mxu0 0.0
    %72 = vmatpush1.xpose.msra.mxu0 0.0
    %73 = vmatprep.subr.mxu0 0.0
    %74 = vmatpush1.xpose.msra.mxu0 0.0
    %75 = vmatprep.subr.mxu0 0.0
    %76 = vmatpush1.xpose.msra.mxu0 0.0
    %77 = vmatprep.subr.mxu0 0.0
    %78 = vmatpush1.xpose.msra.mxu0 0.0
    %79 = vmatprep.subr.mxu0 0.0
    %80 = vmatpush1.xpose.msra.mxu0 0.0
    %81 = vmatprep.subr.mxu0 0.0
    %82 = vmatpush1.xpose.msra.mxu0 0.0
    %83 = vmatprep.subr.mxu0 0.0
    %84 = vmatpush1.xpose.msra.mxu0 0.0
    %85 = vmatprep.subr.mxu0 0.0
    %86 = vmatpush1.xpose.msra.mxu0 0.0
    %87 = vmatprep.subr.mxu0 0.0
    %88 = vmatpush1.xpose.msra.mxu0 0.0
    %89 = vmatprep.subr.mxu0 0.0
    %90 = vmatpush1.xpose.msra.mxu0 0.0
    %91 = vmatprep.subr.mxu0 0.0
    %92 = vmatpush1.xpose.msra.mxu0 0.0
    %93 = vmatprep.subr.mxu0 0.0
    %94 = vmatpush1.xpose.msra.mxu0 0.0
    %95 = vmatprep.subr.mxu0 0.0
    %96 = vmatpush1.xpose.msra.mxu0 0.0
    %97 = vmatprep.subr.mxu0 0.0
    %98 = vmatpush1.xpose.msra.mxu0 0.0
    %99 = vmatprep.subr.mxu0 %v15
    %100 = vmatpush1.xpose.msra.mxu0 %v14
    %101 = vmatprep.subr.mxu0 0.0
    %102 = vmatpush2.xpose.msra.mxu0 0.0
    %103 = vmatprep.subr.mxu0 0.0
    %104 = vmatpush2.xpose.msra.mxu0 0.0
    %105 = vmatprep.subr.mxu0 0.0
    %106 = vmatpush2.xpose.msra.mxu0 0.0
    %107 = vmatprep.subr.mxu0 0.0
    %108 = vmatpush2.xpose.msra.mxu0 0.0
    %109 = vmatprep.subr.mxu0 0.0
    %110 = vmatpush2.xpose.msra.mxu0 0.0
    %111 = vmatprep.subr.mxu0 0.0
    %112 = vmatpush2.xpose.msra.mxu0 0.0
    %113 = vmatprep.subr.mxu0 0.0
    %114 = vmatpush2.xpose.msra.mxu0 0.0
    %115 = vmatprep.subr.mxu0 0.0
    %116 = vmatpush2.xpose.msra.mxu0 0.0
    %117 = vmatprep.subr.mxu0 0.0
    %118 = vmatpush2.xpose.msra.mxu0 0.0
    %119 = vmatprep.subr.mxu0 0.0
    %120 = vmatpush2.xpose.msra.mxu0 0.0
    %121 = vmatprep.subr.mxu0 0.0
    %122 = vmatpush2.xpose.msra.mxu0 0.0
    %123 = vmatprep.subr.mxu0 0.0
    %124 = vmatpush2.xpose.msra.mxu0 0.0
    %125 = vmatprep.subr.mxu0 0.0
    %126 = vmatpush2.xpose.msra.mxu0 0.0
    %127 = vmatprep.subr.mxu0 0.0
    %128 = vmatpush2.xpose.msra.mxu0 0.0
    %129 = vmatprep.subr.mxu0 0.0
    %130 = vmatpush2.xpose.msra.mxu0 0.0
    %131 = vmatprep.subr.mxu0 0.0
    %132 = vmatpush2.xpose.msra.mxu0 0.0
    %133 = vmatprep.mubr.f32.mxu0 %v42
    %134 = vmatmul.mubr.f32.gmra.mxu0 %v34
    %v135 = vpop.f32.mrf.mxu0
    %v136 = vadd.f32 %v23, %v135
    %v137 = vpop.f32.mrf.mxu0
    %138 = vdwg.mxu0
    %139 = vmatprep.subr.mxu0 0.0
    %140 = vmatpush1.xpose.msra.mxu0 0.0
    %141 = vmatprep.subr.mxu0 0.0
    %142 = vmatpush1.xpose.msra.mxu0 0.0
    %143 = vmatprep.subr.mxu0 0.0
    %144 = vmatpush1.xpose.msra.mxu0 0.0
    %145 = vmatprep.subr.mxu0 0.0
    %146 = vmatpush1.xpose.msra.mxu0 0.0
    %147 = vmatprep.subr.mxu0 0.0
    %148 = vmatpush1.xpose.msra.mxu0 0.0
    %149 = vmatprep.subr.mxu0 0.0
    %150 = vmatpush1.xpose.msra.mxu0 0.0
    %151 = vmatprep.subr.mxu0 0.0
    %152 = vmatpush1.xpose.msra.mxu0 0.0
    %153 = vmatprep.subr.mxu0 0.0
    %154 = vmatpush1.xpose.msra.mxu0 0.0
    %155 = vmatprep.subr.mxu0 0.0
    %156 = vmatpush1.xpose.msra.mxu0 0.0
    %157 = vmatprep.subr.mxu0 0.0
    %158 = vmatpush1.xpose.msra.mxu0 0.0
    %159 = vmatprep.subr.mxu0 0.0
    %160 = vmatpush1.xpose.msra.mxu0 0.0
    %161 = vmatprep.subr.mxu0 0.0
    %162 = vmatpush1.xpose.msra.mxu0 0.0
    %163 = vmatprep.subr.mxu0 0.0
    %164 = vmatpush1.xpose.msra.mxu0 0.0
    %165 = vmatprep.subr.mxu0 0.0
    %166 = vmatpush1.xpose.msra.mxu0 0.0
    %167 = vmatprep.subr.mxu0 0.0
    %168 = vmatpush1.xpose.msra.mxu0 0.0
    %169 = vmatprep.subr.mxu0 %v17
    %170 = vmatpush1.xpose.msra.mxu0 %v16
    %171 = vmatprep.subr.mxu0 0.0
    %172 = vmatpush2.xpose.msra.mxu0 0.0
    %173 = vmatprep.subr.mxu0 0.0
    %174 = vmatpush2.xpose.msra.mxu0 0.0
    %175 = vmatprep.subr.mxu0 0.0
    %176 = vmatpush2.xpose.msra.mxu0 0.0
    %177 = vmatprep.subr.mxu0 0.0
    %178 = vmatpush2.xpose.msra.mxu0 0.0
    %179 = vmatprep.subr.mxu0 0.0
    %180 = vmatpush2.xpose.msra.mxu0 0.0
    %181 = vmatprep.subr.mxu0 0.0
    %182 = vmatpush2.xpose.msra.mxu0 0.0
    %183 = vmatprep.subr.mxu0 0.0
    %184 = vmatpush2.xpose.msra.mxu0 0.0
    %185 = vmatprep.subr.mxu0 0.0
    %186 = vmatpush2.xpose.msra.mxu0 0.0
    %187 = vmatprep.subr.mxu0 0.0
    %188 = vmatpush2.xpose.msra.mxu0 0.0
    %189 = vmatprep.subr.mxu0 0.0
    %190 = vmatpush2.xpose.msra.mxu0 0.0
    %191 = vmatprep.subr.mxu0 0.0
    %192 = vmatpush2.xpose.msra.mxu0 0.0
    %193 = vmatprep.subr.mxu0 0.0
    %194 = vmatpush2.xpose.msra.mxu0 0.0
    %195 = vmatprep.subr.mxu0 0.0
    %196 = vmatpush2.xpose.msra.mxu0 0.0
    %197 = vmatprep.subr.mxu0 0.0
    %198 = vmatpush2.xpose.msra.mxu0 0.0
    %199 = vmatprep.subr.mxu0 0.0
    %200 = vmatpush2.xpose.msra.mxu0 0.0
    %201 = vmatprep.subr.mxu0 0.0
    %202 = vmatpush2.xpose.msra.mxu0 0.0
    %203 = vmatprep.mubr.f32.mxu0 %v43
    %204 = vmatmul.mubr.f32.gmra.mxu0 %v41
    %v205 = vpop.f32.mrf.mxu0
    %v206 = vadd.f32 %v136, %v205
    %v207 = vpop.f32.mrf.mxu0
    %208 = vdwg.mxu0
    %209 = vmatprep.subr.mxu0 0.0
    %210 = vmatpush1.xpose.msra.mxu0 0.0
    %211 = vmatprep.subr.mxu0 0.0
    %212 = vmatpush1.xpose.msra.mxu0 0.0
    %213 = vmatprep.subr.mxu0 0.0
    %214 = vmatpush1.xpose.msra.mxu0 0.0
    %215 = vmatprep.subr.mxu0 0.0
    %216 = vmatpush1.xpose.msra.mxu0 0.0
    %217 = vmatprep.subr.mxu0 0.0
    %218 = vmatpush1.xpose.msra.mxu0 0.0
    %219 = vmatprep.subr.mxu0 0.0
    %220 = vmatpush1.xpose.msra.mxu0 0.0
    %221 = vmatprep.subr.mxu0 0.0
    %222 = vmatpush1.xpose.msra.mxu0 0.0
    %223 = vmatprep.subr.mxu0 0.0
    %224 = vmatpush1.xpose.msra.mxu0 0.0
    %225 = vmatprep.subr.mxu0 0.0
    %226 = vmatpush1.xpose.msra.mxu0 0.0
    %227 = vmatprep.subr.mxu0 0.0
    %228 = vmatpush1.xpose.msra.mxu0 0.0
    %229 = vmatprep.subr.mxu0 0.0
    %230 = vmatpush1.xpose.msra.mxu0 0.0
    %231 = vmatprep.subr.mxu0 0.0
    %232 = vmatpush1.xpose.msra.mxu0 0.0
    %233 = vmatprep.subr.mxu0 0.0
    %234 = vmatpush1.xpose.msra.mxu0 0.0
    %235 = vmatprep.subr.mxu0 0.0
    %236 = vmatpush1.xpose.msra.mxu0 0.0
    %237 = vmatprep.subr.mxu0 0.0
    %238 = vmatpush1.xpose.msra.mxu0 0.0
    %239 = vmatprep.subr.mxu0 %v19
    %240 = vmatpush1.xpose.msra.mxu0 %v18
    %241 = vmatprep.subr.mxu0 0.0
    %242 = vmatpush2.xpose.msra.mxu0 0.0
    %243 = vmatprep.subr.mxu0 0.0
    %244 = vmatpush2.xpose.msra.mxu0 0.0
    %245 = vmatprep.subr.mxu0 0.0
    %246 = vmatpush2.xpose.msra.mxu0 0.0
    %247 = vmatprep.subr.mxu0 0.0
    %248 = vmatpush2.xpose.msra.mxu0 0.0
    %249 = vmatprep.subr.mxu0 0.0
    %250 = vmatpush2.xpose.msra.mxu0 0.0
    %251 = vmatprep.subr.mxu0 0.0
    %252 = vmatpush2.xpose.msra.mxu0 0.0
    %253 = vmatprep.subr.mxu0 0.0
    %254 = vmatpush2.xpose.msra.mxu0 0.0
    %255 = vmatprep.subr.mxu0 0.0
    %256 = vmatpush2.xpose.msra.mxu0 0.0
    %257 = vmatprep.subr.mxu0 0.0
    %258 = vmatpush2.xpose.msra.mxu0 0.0
    %259 = vmatprep.subr.mxu0 0.0
    %260 = vmatpush2.xpose.msra.mxu0 0.0
    %261 = vmatprep.subr.mxu0 0.0
    %262 = vmatpush2.xpose.msra.mxu0 0.0
    %263 = vmatprep.subr.mxu0 0.0
    %264 = vmatpush2.xpose.msra.mxu0 0.0
    %265 = vmatprep.subr.mxu0 0.0
    %266 = vmatpush2.xpose.msra.mxu0 0.0
    %267 = vmatprep.subr.mxu0 0.0
    %268 = vmatpush2.xpose.msra.mxu0 0.0
    %269 = vmatprep.subr.mxu0 0.0
    %270 = vmatpush2.xpose.msra.mxu0 0.0
    %271 = vmatprep.subr.mxu0 0.0
    %272 = vmatpush2.xpose.msra.mxu0 0.0
    %273 = vmatprep.mubr.f32.mxu0 %v59
    %274 = vmatmul.mubr.f32.gmra.mxu0 %v51
    %v275 = vpop.f32.mrf.mxu0
    %v276 = vadd.f32 %v206, %v275
    %v277 = vpop.f32.mrf.mxu0
    %278 = vdwg.mxu0
    %279 = vmatprep.subr.mxu0 0.0
    %280 = vmatpush1.xpose.msra.mxu0 0.0
    %281 = vmatprep.subr.mxu0 0.0
    %282 = vmatpush1.xpose.msra.mxu0 0.0
    %283 = vmatprep.subr.mxu0 0.0
    %284 = vmatpush1.xpose.msra.mxu0 0.0
    %285 = vmatprep.subr.mxu0 0.0
    %286 = vmatpush1.xpose.msra.mxu0 0.0
    %287 = vmatprep.subr.mxu0 0.0
    %288 = vmatpush1.xpose.msra.mxu0 0.0
    %289 = vmatprep.subr.mxu0 0.0
    %290 = vmatpush1.xpose.msra.mxu0 0.0
    %291 = vmatprep.subr.mxu0 0.0
    %292 = vmatpush1.xpose.msra.mxu0 0.0
    %293 = vmatprep.subr.mxu0 0.0
    %294 = vmatpush1.xpose.msra.mxu0 0.0
    %295 = vmatprep.subr.mxu0 0.0
    %296 = vmatpush1.xpose.msra.mxu0 0.0
    %297 = vmatprep.subr.mxu0 0.0
    %298 = vmatpush1.xpose.msra.mxu0 0.0
    %299 = vmatprep.subr.mxu0 0.0
    %300 = vmatpush1.xpose.msra.mxu0 0.0
    %301 = vmatprep.subr.mxu0 0.0
    %302 = vmatpush1.xpose.msra.mxu0 0.0
    %303 = vmatprep.subr.mxu0 0.0
    %304 = vmatpush1.xpose.msra.mxu0 0.0
    %305 = vmatprep.subr.mxu0 0.0
    %306 = vmatpush1.xpose.msra.mxu0 0.0
    %307 = vmatprep.subr.mxu0 0.0
    %308 = vmatpush1.xpose.msra.mxu0 0.0
    %309 = vmatprep.subr.mxu0 %v21
    %310 = vmatpush1.xpose.msra.mxu0 %v20
    %311 = vmatprep.subr.mxu0 0.0
    %312 = vmatpush2.xpose.msra.mxu0 0.0
    %313 = vmatprep.subr.mxu0 0.0
    %314 = vmatpush2.xpose.msra.mxu0 0.0
    %315 = vmatprep.subr.mxu0 0.0
    %316 = vmatpush2.xpose.msra.mxu0 0.0
    %317 = vmatprep.subr.mxu0 0.0
    %318 = vmatpush2.xpose.msra.mxu0 0.0
    %319 = vmatprep.subr.mxu0 0.0
    %320 = vmatpush2.xpose.msra.mxu0 0.0
    %321 = vmatprep.subr.mxu0 0.0
    %322 = vmatpush2.xpose.msra.mxu0 0.0
    %323 = vmatprep.subr.mxu0 0.0
    %324 = vmatpush2.xpose.msra.mxu0 0.0
    %325 = vmatprep.subr.mxu0 0.0
    %326 = vmatpush2.xpose.msra.mxu0 0.0
    %327 = vmatprep.subr.mxu0 0.0
    %328 = vmatpush2.xpose.msra.mxu0 0.0
    %329 = vmatprep.subr.mxu0 0.0
    %330 = vmatpush2.xpose.msra.mxu0 0.0
    %331 = vmatprep.subr.mxu0 0.0
    %332 = vmatpush2.xpose.msra.mxu0 0.0
    %333 = vmatprep.subr.mxu0 0.0
    %334 = vmatpush2.xpose.msra.mxu0 0.0
    %335 = vmatprep.subr.mxu0 0.0
    %336 = vmatpush2.xpose.msra.mxu0 0.0
    %337 = vmatprep.subr.mxu0 0.0
    %338 = vmatpush2.xpose.msra.mxu0 0.0
    %339 = vmatprep.subr.mxu0 0.0
    %340 = vmatpush2.xpose.msra.mxu0 0.0
    %341 = vmatprep.subr.mxu0 0.0
    %342 = vmatpush2.xpose.msra.mxu0 0.0
    %343 = vmatprep.mubr.f32.mxu0 %v60
    %344 = vmatmul.mubr.f32.gmra.mxu0 %v58
    %v345 = vpop.f32.mrf.mxu0
    %v346 = vadd.f32 %v276, %v345
    %v347 = vpop.f32.mrf.mxu0
    %348 = vdwg.mxu0
    %v349 = vtanh.pop %v346
    %vm350 = vcmask 64512
    %v352 = vsel %vm350, %v349, 0
    %354 = vmatprep.subr.mxu0 0.0
    %355 = vmatpush1.msra.mxu0 0.0
    %356 = vmatprep.subr.mxu0 0.0
    %357 = vmatpush1.msra.mxu0 0.0
    %358 = vmatprep.subr.mxu0 0.0
    %359 = vmatpush1.msra.mxu0 0.0
    %360 = vmatprep.subr.mxu0 0.0
    %361 = vmatpush1.msra.mxu0 0.0
    %362 = vmatprep.subr.mxu0 0.0
    %363 = vmatpush1.msra.mxu0 0.0
    %364 = vmatprep.subr.mxu0 0.0
    %365 = vmatpush1.msra.mxu0 0.0
    %366 = vmatprep.subr.mxu0 0.0
    %367 = vmatpush1.msra.mxu0 0.0
    %368 = vmatprep.subr.mxu0 0.0
    %369 = vmatpush1.msra.mxu0 0.0
    %370 = vmatprep.subr.mxu0 0.0
    %371 = vmatpush1.msra.mxu0 0.0
    %372 = vmatprep.subr.mxu0 0.0
    %373 = vmatpush1.msra.mxu0 0.0
    %374 = vmatprep.subr.mxu0 0.0
    %375 = vmatpush1.msra.mxu0 0.0
    %376 = vmatprep.subr.mxu0 0.0
    %377 = vmatpush1.msra.mxu0 0.0
    %378 = vmatprep.subr.mxu0 0.0
    %379 = vmatpush1.msra.mxu0 0.0
    %380 = vmatprep.subr.mxu0 0.0
    %381 = vmatpush1.msra.mxu0 0.0
    %382 = vmatprep.subr.mxu0 0.0
    %383 = vmatpush1.msra.mxu0 0.0
    %384 = vmatprep.subr.mxu0 0.0
    %385 = vmatpush1.msra.mxu0 %v22
    %386 = vmatprep.subr.mxu0 0.0
    %387 = vmatpush2.msra.mxu0 0.0
    %388 = vmatprep.subr.mxu0 0.0
    %389 = vmatpush2.msra.mxu0 0.0
    %390 = vmatprep.subr.mxu0 0.0
    %391 = vmatpush2.msra.mxu0 0.0
    %392 = vmatprep.subr.mxu0 0.0
    %393 = vmatpush2.msra.mxu0 0.0
    %394 = vmatprep.subr.mxu0 0.0
    %395 = vmatpush2.msra.mxu0 0.0
    %396 = vmatprep.subr.mxu0 0.0
    %397 = vmatpush2.msra.mxu0 0.0
    %398 = vmatprep.subr.mxu0 0.0
    %399 = vmatpush2.msra.mxu0 0.0
    %400 = vmatprep.subr.mxu0 0.0
    %401 = vmatpush2.msra.mxu0 0.0
    %402 = vmatprep.subr.mxu0 0.0
    %403 = vmatpush2.msra.mxu0 0.0
    %404 = vmatprep.subr.mxu0 0.0
    %405 = vmatpush2.msra.mxu0 0.0
    %406 = vmatprep.subr.mxu0 0.0
    %407 = vmatpush2.msra.mxu0 0.0
    %408 = vmatprep.subr.mxu0 0.0
    %409 = vmatpush2.msra.mxu0 0.0
    %410 = vmatprep.subr.mxu0 0.0
    %411 = vmatpush2.msra.mxu0 0.0
    %412 = vmatprep.subr.mxu0 0.0
    %413 = vmatpush2.msra.mxu0 0.0
    %414 = vmatprep.subr.mxu0 0.0
    %415 = vmatpush2.msra.mxu0 0.0
    %416 = vmatprep.subr.mxu0 0.0
    %417 = vmatpush2.msra.mxu0 0.0
    %418 = vmatprep.mubr.f32.mxu0 0.0
    %419 = vmatmul.mubr.f32.gmra.mxu0 %v352
    %v420 = vpop.f32.mrf.mxu0
    %v421 = vadd.f32 %v24, %v420
    %v422 = vpop.f32.mrf.mxu0
    %423 = vdwg.mxu0
    %vm424 = vcmask 58368
    %425 = vst.msk [vmem:[#allocation2] sm:$0x3] %vm424, %v421
    // Predicated region
    $region10: #{basic_4twlffd_forward.1} parent=1 // pred_check
      _
    $region11: #{basic_4twlffd_forward.1} parent=1 // pred_check_branch
      %427 = sbr.rel (0) target = $region13
    $region12: #{basic_4twlffd_forward.1} parent=1 // pred_region
      %s429 = ssub.s32 32, 32
      %430 = vsyncadd [#allocation3], %s429
      %s432 = sshll.u32 [#allocation2], 4
      %s433 = int_to_ptr.vmem [resolvable:$true] %s432
      %435 = dma.vmem_to_hbm [thread:$0]  %s433, 32, %s2, [#allocation3]
    $region13: #{basic_4twlffd_forward.1} parent=1 // pred_fallthru
      _
    // Predicated region
    $region14: #{basic_4twlffd_forward.1} parent=1 // pred_check
      _
    $region15: #{basic_4twlffd_forward.1} parent=1 // pred_check_branch
      %437 = sbr.rel (0) target = $region17
    $region16: #{basic_4twlffd_forward.1} parent=1 // pred_region
      %438 = dma.done [#allocation3], 32
    $region17: #{basic_4twlffd_forward.1} parent=1 // pred_fallthru
      _
    %439 = vsyncpa [#allocation3], 1

</llo_original>
